<compile_context>
chip_gen: v5e
topology: v5e:2x2
jax: 0.10.0
libtpu: 0.0.40
codegen_flags: <defaults>
</compile_context>

<pallas_src>
import functools
import math

import jax
import jax.numpy as jnp
from jax.experimental import pallas as pl
from jax.experimental.pallas import tpu as pltpu


# ----------------------- static-exponent pow specialization -----------------------

def _ipow(x, n: int):
    """x**n for integer n >= 1 via repeated squaring (pure VPU multiplies)."""
    result = None
    while n > 0:
        if n & 1:
            result = x if result is None else result * x
        n >>= 1
        if n:
            x = x * x
    return result


def _half_int(p):
    """Return 2*p as an int if p is a (half-)integer with small magnitude, else None."""
    p = float(p)
    n2 = round(p * 2.0)
    if abs(p * 2.0 - n2) < 1e-6 and n2 != 0 and abs(n2) <= 64:
        return int(n2)
    return None


def _pow(x, p: float):
    """x**p with integer / half-integer p lowered to sqrt/rsqrt + multiplies.

    Generic float exponents fall back to exp(p*log(x)) (single EUP exp + log; preserves the
    0**p limit: 0 for p>0, inf for p<0).  Specializing the hot exponents (e.g. 1/(1-t2) =
    -2.5 for t2 = 1.4) removes EUP work on the tempered-softmax hot path entirely.
    """
    p = float(p)
    if p == 0.0:
        return jnp.ones_like(x)
    if p == 1.0:
        return x
    n2 = _half_int(p)
    if n2 is not None:
        if n2 % 2 == 0:                         # integer exponent
            y = _ipow(x, abs(n2) // 2)
            return y if n2 > 0 else 1.0 / y
        if n2 > 0:                              # positive half-integer
            return _ipow(jnp.sqrt(x), n2)
        return _ipow(jax.lax.rsqrt(x), -n2)     # negative half-integer (0 -> inf, as x**p)
    return jnp.exp(p * jnp.log(x))              # generic fallback


# ----------------------------- tempered math (static t) -----------------------------

def _log_t(u, t: float):
    if t == 1.0:
        return jnp.log(u)
    return (_pow(u, 1.0 - t) - 1.0) / (1.0 - t)


def _exp_t(u, t: float):
    if t == 1.0:
        return jnp.exp(u)
    return _pow(jnp.maximum(1.0 + (1.0 - t) * u, 0.0), 1.0 / (1.0 - t))


def _label_only_terms(v: float, t1: float) -> float:
    """v * log_t(v + 1e-10, t1) - v**(2-t1)/(2-t1) as a trace-time Python float."""
    u = v + 1e-10
    lt = math.log(u) if t1 == 1.0 else (u ** (1.0 - t1) - 1.0) / (1.0 - t1)
    return v * lt - (v ** (2.0 - t1)) / (2.0 - t1)


# ----------------------------------- Pallas kernel -----------------------------------

def _bi_tempered_kernel(labels_ref, act_ref, loss_ref, *, t1: float, t2: float,
                        label_smooth: float, num_iters: int, ignore_index):
    x = act_ref[...].astype(jnp.float32)          # (TM, C), classes on the lane axis
    lab = labels_ref[...]                         # (TM, 1) int32
    tm, num_classes = x.shape

    # ----- trace-time label constants (labels take only two distinct values) -----
    if label_smooth > 0.0:
        hot = (1.0 - label_smooth * num_classes / (num_classes - 1)) + label_smooth / (num_classes - 1)
        cold = label_smooth / (num_classes - 1)
    else:
        hot, cold = 1.0, 0.0
    # sum_c [ v*log_t(v+1e-10,t1) - v**(2-t1)/(2-t1) ] folded to a Python constant
    label_const = _label_only_terms(hot, t1) + (num_classes - 1) * _label_only_terms(cold, t1)

    class_ids = jax.lax.broadcasted_iota(jnp.int32, (tm, num_classes), 1)
    is_hot = class_ids == lab                     # (TM, C) one-hot mask (scatter_ equivalent)

    # ----- tempered softmax with temperature t2 (works entirely on x - mu) -----
    mu = jnp.max(x, axis=-1, keepdims=True)
    na0 = x - mu                                  # x is dead after this line

    one_m_t1 = 1.0 - t1
    inv_2m_t1 = 1.0 / (2.0 - t1)

    if t2 == 1.0:
        e = jnp.exp(na0)
        s = jnp.sum(e, axis=-1, keepdims=True)
        log_p = na0 - jnp.log(s)
        p = e / s
        if t1 == 1.0:
            logt_p = log_p
            p_2mt1 = p
        else:
            p_pow = jnp.exp(one_m_t1 * log_p)     # p^(1-t1) via a single EUP exp
            logt_p = (p_pow - 1.0) / one_m_t1
            p_2mt1 = p_pow * p
    else:
        one_m_t2 = 1.0 - t2
        if t2 > 1.0:
            # compute_normalization_fixed_point (shifted by -mu)
            na = na0
            for _ in range(num_iters):
                lp = jnp.sum(_exp_t(na, t2), axis=-1, keepdims=True)
                na = na0 * _pow(lp, one_m_t2)
            lp = jnp.sum(_exp_t(na, t2), axis=-1, keepdims=True)
            norm_shift = -_log_t(1.0 / lp, t2)    # = norm_const - mu
        else:
            # compute_normalization_binary_search (shifted by -mu)
            eff_dim = jnp.sum((na0 > -1.0 / one_m_t2).astype(jnp.float32),
                              axis=-1, keepdims=True)
            lower = jnp.zeros_like(mu)
            upper = -_log_t(1.0 / eff_dim, t2)
            for _ in range(num_iters):
                logt_partition = (upper + lower) * 0.5
                sum_probs = jnp.sum(_exp_t(na0 - logt_partition, t2),
                                    axis=-1, keepdims=True)
                below = sum_probs < 1.0
                lower = jnp.where(below, lower, logt_partition)
                upper = jnp.where(below, logt_partition, upper)
            norm_shift = (upper + lower) * 0.5

        # final exp_t inlined: p and p^(1-t1) both come from the same base (no generic pow)
        base = jnp.maximum(1.0 + one_m_t2 * (na0 - norm_shift), 0.0)
        inv_e = 1.0 / one_m_t2                    # p       = base**inv_e
        if t1 == 1.0:
            p = _pow(base, inv_e)
            logt_p = jnp.log(p)
            p_2mt1 = p
        else:
            r_e = one_m_t1 / one_m_t2             # p^(1-t1) = base**r_e  (base reuse)
            na2, nb2 = _half_int(inv_e), _half_int(r_e)
            if (na2 is not None and nb2 is not None and (na2 < 0) == (nb2 < 0)
                    and (na2 % 2 != 0 or nb2 % 2 != 0)):
                # share a single sqrt/rsqrt root between both powers (default t1/t2 case)
                root = jax.lax.rsqrt(base) if na2 < 0 else jnp.sqrt(base)
                p = _ipow(root, abs(na2))
                p_pow = _ipow(root, abs(nb2))
            else:
                p = _pow(base, inv_e)
                p_pow = _pow(base, r_e)
            logt_p = (p_pow - 1.0) / one_m_t1
            p_2mt1 = p_pow * p                    # p^(2-t1)

    # ----- per-row loss (label terms constant-folded; one surviving (TM,C) select) -----
    hot_logt = jnp.sum(jnp.where(is_hot, logt_p, 0.0), axis=-1)        # (TM,)
    if cold != 0.0:
        cross = cold * jnp.sum(logt_p, axis=-1) + (hot - cold) * hot_logt
    else:
        cross = hot_logt                                               # hot == 1.0
    row_loss = label_const - cross + jnp.sum(p_2mt1, axis=-1) * inv_2m_t1

    if ignore_index is not None:                  # fold ignore_index mask in-kernel
        row_loss = jnp.where(lab[:, 0] != ignore_index, row_loss, 0.0)

    # per-row loss, stored lane-dense as a (1, 1, TM) slab
    loss_ref[0, 0, :] = row_loss


# ----------------------------------- wrapper (module) -----------------------------------

class BiTemperedLogisticLossPallas:
    def __init__(self, t1: float, t2: float, label_smooth: float = 0.0,
                 ignore_index=None, reduction: str = "mean", num_iters: int = 5,
                 block_rows: int = 1024):
        self.t1 = float(t1)
        self.t2 = float(t2)
        self.label_smooth = float(label_smooth)
        self.ignore_index = ignore_index
        self.reduction = reduction
        self.num_iters = int(num_iters)
        self.block_rows = int(block_rows)

    def _row_tile(self, n: int, c: int) -> int:
        # ~4 MiB per (tm, c) f32 tile: after the live-range cuts ~10 live temporaries plus
        # double-buffered inputs stay inside the v7x 64 MiB VMEM (plenty on v5e/v6e).
        cap = max(8, (4 * 1024 * 1024) // (c * 4))
        tm = min(self.block_rows, cap)
        if n >= 256:
            # keep >= 2 grid blocks so the "parallel" axis engages both v7x TensorCores
            half = ((n + 1) // 2 + 127) // 128 * 128
            tm = min(tm, half)
        if n <= tm:
            return n                              # single block, exactly the batch
        if tm >= 128:
            tm = (tm // 128) * 128                # lane-dense output blocks
        else:
            tm = max(8, (tm // 8) * 8)
        return tm

    def __call__(self, predictions: jnp.ndarray, targets: jnp.ndarray) -> jnp.ndarray:
        n, c = predictions.shape
        tm = self._row_tile(n, c)
        num_blocks = (n + tm - 1) // tm           # cdiv grid; last block may be partial

        labels_2d = targets.astype(jnp.int32).reshape(n, 1)

        kernel = functools.partial(
            _bi_tempered_kernel,
            t1=self.t1, t2=self.t2, label_smooth=self.label_smooth,
            num_iters=self.num_iters, ignore_index=self.ignore_index)

        # always set vmem_limit_bytes: v5e's default scoped limit is only 16 MiB
        itemsize = jnp.dtype(predictions.dtype).itemsize
        est_vmem = (12 * 4 + 4 * itemsize) * tm * c + (2 << 20)
        vmem_limit = int(min(max(est_vmem, 32 << 20), 48 << 20))

        per_row = pl.pallas_call(
            kernel,
            out_shape=jax.ShapeDtypeStruct((num_blocks, 1, tm), jnp.float32),
            grid_spec=pltpu.PrefetchScalarGridSpec(
                num_scalar_prefetch=0,
                grid=(num_blocks,),
                in_specs=[
                    pl.BlockSpec((tm, 1), lambda i: (i, 0)),   # labels
                    pl.BlockSpec((tm, c), lambda i: (i, 0)),   # activations (any float dtype)
                ],
                out_specs=pl.BlockSpec((1, 1, tm), lambda i: (i, 0, 0)),
            ),
            compiler_params=pltpu.CompilerParams(
                dimension_semantics=("parallel",),
                vmem_limit_bytes=vmem_limit),
        )(labels_2d, predictions)

        loss = per_row.reshape(num_blocks * tm)[:n]   # drop rows of the partial last block

        if self.reduction == "mean":
            # matches the PyTorch module: ignored rows are zeroed but still counted
            return jnp.mean(loss)
        if self.reduction == "sum":
            return jnp.sum(loss)
        return loss


# ----------------------------------- pure-JAX reference -----------------------------------

def _ref_log_t(u, t):
    return jnp.log(u) if t == 1.0 else (u ** (1.0 - t) - 1.0) / (1.0 - t)


def _ref_exp_t(u, t):
    if t == 1.0:
        return jnp.exp(u)
    return jnp.maximum(1.0 + (1.0 - t) * u, 0.0) ** (1.0 / (1.0 - t))


def _reference(predictions, targets, t1, t2, label_smooth, ignore_index, reduction, num_iters=5):
    n, c = predictions.shape
    onehot = jax.nn.one_hot(targets, c, dtype=predictions.dtype)
    if label_smooth > 0.0:
        onehot = (1.0 - label_smooth * c / (c - 1)) * onehot + label_smooth / (c - 1)
    x = predictions
    mu = jnp.max(x, axis=-1, keepdims=True)
    na0 = x - mu
    if t2 == 1.0:
        probs = jax.nn.softmax(x, axis=-1)
    elif t2 > 1.0:
        na = na0
        for _ in range(num_iters):
            lp = jnp.sum(_ref_exp_t(na, t2), axis=-1, keepdims=True)
            na = na0 * lp ** (1.0 - t2)
        lp = jnp.sum(_ref_exp_t(na, t2), axis=-1, keepdims=True)
        probs = _ref_exp_t(x - (-_ref_log_t(1.0 / lp, t2) + mu), t2)
    else:
        eff = jnp.sum((na0 > -1.0 / (1.0 - t2)).astype(x.dtype), axis=-1, keepdims=True)
        lo = jnp.zeros_like(mu)
        up = -_ref_log_t(1.0 / eff, t2)
        for _ in range(num_iters):
            lpart = (up + lo) * 0.5
            sp = jnp.sum(_ref_exp_t(na0 - lpart, t2), axis=-1, keepdims=True)
            upd = (sp < 1.0).astype(x.dtype)
            lo = lo * upd + (1.0 - upd) * lpart
            up = up * (1.0 - upd) + upd * lpart
        probs = _ref_exp_t(x - ((up + lo) * 0.5 + mu), t2)
    lv = (onehot * _ref_log_t(onehot + 1e-10, t1) - onehot * _ref_log_t(probs, t1)
          - onehot ** (2.0 - t1) / (2.0 - t1) + probs ** (2.0 - t1) / (2.0 - t1))
    loss = jnp.sum(lv, axis=-1)
    if ignore_index is not None:
        loss = loss * (targets != ignore_index).astype(loss.dtype)
    if reduction == "mean":
        return jnp.mean(loss)
    if reduction == "sum":
        return jnp.sum(loss)
    return loss


# ----------------------------------------- main -----------------------------------------

if __name__ == "__main__":
    key = jax.random.PRNGKey(0)
    k1, k2, k3, k4 = jax.random.split(key, 4)

    # Test 1: default temperatures (t2 > 1 fixed-point path), label smoothing, mean.
    N1, C1 = 16, 128
    preds1 = jax.random.normal(k1, (N1, C1), dtype=jnp.float32) * 2.0
    tgts1 = jax.random.randint(k2, (N1,), 0, C1, dtype=jnp.int32)
    loss_fn1 = BiTemperedLogisticLossPallas(t1=0.8, t2=1.4, label_smooth=0.1,
                                            ignore_index=None, reduction="mean")
    out1 = jax.block_until_ready(loss_fn1(preds1, tgts1))
    ref1 = jax.block_until_ready(_reference(preds1, tgts1, 0.8, 1.4, 0.1, None, "mean"))
    assert bool(jnp.isfinite(out1)), out1
    assert jnp.allclose(out1, ref1, rtol=1e-3, atol=1e-5), (out1, ref1)

    # Test 2: t2 < 1 binary-search path, no smoothing, ignore_index, sum reduction.
    N2, C2 = 24, 32
    preds2 = jax.random.normal(k3, (N2, C2), dtype=jnp.float32) * 2.0
    tgts2 = jax.random.randint(k4, (N2,), 0, C2, dtype=jnp.int32)
    loss_fn2 = BiTemperedLogisticLossPallas(t1=0.9, t2=0.7, label_smooth=0.0,
                                            ignore_index=3, reduction="sum")
    out2 = jax.block_until_ready(loss_fn2(preds2, tgts2))
    ref2 = jax.block_until_ready(_reference(preds2, tgts2, 0.9, 0.7, 0.0, 3, "sum"))
    assert bool(jnp.isfinite(out2)), out2
    assert jnp.allclose(out2, ref2, rtol=1e-3, atol=1e-5), (out2, ref2)

    print("KERNEL_OK")
</pallas_src>

<mosaic_0001>
module attributes {stable_mosaic.version = 11 : i64} {
  func.func @_bi_tempered_kernel(%arg0: i32, %arg1: memref<16x1xi32, #tpu.memory_space<vmem>>, %arg2: memref<16x128xf32, #tpu.memory_space<vmem>>, %arg3: memref<1x1x16xf32, #tpu.memory_space<vmem>>) attributes {dimension_semantics = [#tpu.dimension_semantics<parallel>], iteration_bounds = array<i64: 1>, scalar_prefetch = 0 : i64, scratch_operands = 0 : i64, tpu.core_type = #tpu.core_type<tc>, window_params = [{transform_indices = @transform_0, window_bounds = array<i64: 16, 1>}, {transform_indices = @transform_1, window_bounds = array<i64: 16, 128>}, {transform_indices = @transform_2, window_bounds = array<i64: 1, 1, 16>}]} {
    %c0 = arith.constant 0 : index
    %c0_0 = arith.constant 0 : index
    %0 = vector.load %arg2[%c0, %c0_0] : memref<16x128xf32, #tpu.memory_space<vmem>>, vector<16x128xf32>
    %c0_1 = arith.constant 0 : index
    %c0_2 = arith.constant 0 : index
    %1 = vector.load %arg1[%c0_1, %c0_2] : memref<16x1xi32, #tpu.memory_space<vmem>>, vector<16x1xi32>
    %2 = tpu.iota {dimensions = array<i32: 1>} : vector<16x128xi32>
    %3 = vector.broadcast %1 : vector<16x1xi32> to vector<16x128xi32>
    %4 = arith.cmpi eq, %2, %3 : vector<16x128xi32>
    %cst = arith.constant dense<0xFF800000> : vector<16xf32>
    %5 = vector.multi_reduction <maximumf>, %0, %cst [1] : vector<16x128xf32> to vector<16xf32>
    %6 = vector.shape_cast %5 : vector<16xf32> to vector<16x1xf32>
    %7 = vector.broadcast %6 : vector<16x1xf32> to vector<16x128xf32>
    %8 = arith.subf %0, %7 : vector<16x128xf32>
    %cst_3 = arith.constant -4.000000e-01 : f32
    %9 = vector.broadcast %cst_3 : f32 to vector<16x128xf32>
    %10 = arith.mulf %9, %8 : vector<16x128xf32>
    %cst_4 = arith.constant 1.000000e+00 : f32
    %11 = vector.broadcast %cst_4 : f32 to vector<16x128xf32>
    %12 = arith.addf %11, %10 : vector<16x128xf32>
    %cst_5 = arith.constant 0.000000e+00 : f32
    %13 = vector.broadcast %cst_5 : f32 to vector<16x128xf32>
    %14 = arith.maximumf %12, %13 : vector<16x128xf32>
    %15 = math.rsqrt %14 : vector<16x128xf32>
    %16 = arith.mulf %15, %15 : vector<16x128xf32>
    %17 = arith.mulf %16, %16 : vector<16x128xf32>
    %18 = arith.mulf %15, %17 : vector<16x128xf32>
    %cst_6 = arith.constant dense<0.000000e+00> : vector<16xf32>
    %19 = vector.multi_reduction <add>, %18, %cst_6 [1] : vector<16x128xf32> to vector<16xf32>
    %20 = vector.shape_cast %19 : vector<16xf32> to vector<16x1xf32>
    %21 = math.log %20 : vector<16x1xf32>
    %cst_7 = arith.constant -4.000000e-01 : f32
    %22 = vector.broadcast %cst_7 : f32 to vector<16x1xf32>
    %23 = arith.mulf %22, %21 : vector<16x1xf32>
    %24 = math.exp %23 : vector<16x1xf32>
    %25 = vector.broadcast %24 : vector<16x1xf32> to vector<16x128xf32>
    %26 = arith.mulf %8, %25 : vector<16x128xf32>
    %cst_8 = arith.constant -4.000000e-01 : f32
    %27 = vector.broadcast %cst_8 : f32 to vector<16x128xf32>
    %28 = arith.mulf %27, %26 : vector<16x128xf32>
    %cst_9 = arith.constant 1.000000e+00 : f32
    %29 = vector.broadcast %cst_9 : f32 to vector<16x128xf32>
    %30 = arith.addf %29, %28 : vector<16x128xf32>
    %cst_10 = arith.constant 0.000000e+00 : f32
    %31 = vector.broadcast %cst_10 : f32 to vector<16x128xf32>
    %32 = arith.maximumf %30, %31 : vector<16x128xf32>
    %33 = math.rsqrt %32 : vector<16x128xf32>
    %34 = arith.mulf %33, %33 : vector<16x128xf32>
    %35 = arith.mulf %34, %34 : vector<16x128xf32>
    %36 = arith.mulf %33, %35 : vector<16x128xf32>
    %cst_11 = arith.constant dense<0.000000e+00> : vector<16xf32>
    %37 = vector.multi_reduction <add>, %36, %cst_11 [1] : vector<16x128xf32> to vector<16xf32>
    %38 = vector.shape_cast %37 : vector<16xf32> to vector<16x1xf32>
    %39 = math.log %38 : vector<16x1xf32>
    %cst_12 = arith.constant -4.000000e-01 : f32
    %40 = vector.broadcast %cst_12 : f32 to vector<16x1xf32>
    %41 = arith.mulf %40, %39 : vector<16x1xf32>
    %42 = math.exp %41 : vector<16x1xf32>
    %43 = vector.broadcast %42 : vector<16x1xf32> to vector<16x128xf32>
    %44 = arith.mulf %8, %43 : vector<16x128xf32>
    %cst_13 = arith.constant -4.000000e-01 : f32
    %45 = vector.broadcast %cst_13 : f32 to vector<16x128xf32>
    %46 = arith.mulf %45, %44 : vector<16x128xf32>
    %cst_14 = arith.constant 1.000000e+00 : f32
    %47 = vector.broadcast %cst_14 : f32 to vector<16x128xf32>
    %48 = arith.addf %47, %46 : vector<16x128xf32>
    %cst_15 = arith.constant 0.000000e+00 : f32
    %49 = vector.broadcast %cst_15 : f32 to vector<16x128xf32>
    %50 = arith.maximumf %48, %49 : vector<16x128xf32>
    %51 = math.rsqrt %50 : vector<16x128xf32>
    %52 = arith.mulf %51, %51 : vector<16x128xf32>
    %53 = arith.mulf %52, %52 : vector<16x128xf32>
    %54 = arith.mulf %51, %53 : vector<16x128xf32>
    %cst_16 = arith.constant dense<0.000000e+00> : vector<16xf32>
    %55 = vector.multi_reduction <add>, %54, %cst_16 [1] : vector<16x128xf32> to vector<16xf32>
    %56 = vector.shape_cast %55 : vector<16xf32> to vector<16x1xf32>
    %57 = math.log %56 : vector<16x1xf32>
    %cst_17 = arith.constant -4.000000e-01 : f32
    %58 = vector.broadcast %cst_17 : f32 to vector<16x1xf32>
    %59 = arith.mulf %58, %57 : vector<16x1xf32>
    %60 = math.exp %59 : vector<16x1xf32>
    %61 = vector.broadcast %60 : vector<16x1xf32> to vector<16x128xf32>
    %62 = arith.mulf %8, %61 : vector<16x128xf32>
    %cst_18 = arith.constant -4.000000e-01 : f32
    %63 = vector.broadcast %cst_18 : f32 to vector<16x128xf32>
    %64 = arith.mulf %63, %62 : vector<16x128xf32>
    %cst_19 = arith.constant 1.000000e+00 : f32
    %65 = vector.broadcast %cst_19 : f32 to vector<16x128xf32>
    %66 = arith.addf %65, %64 : vector<16x128xf32>
    %cst_20 = arith.constant 0.000000e+00 : f32
    %67 = vector.broadcast %cst_20 : f32 to vector<16x128xf32>
    %68 = arith.maximumf %66, %67 : vector<16x128xf32>
    %69 = math.rsqrt %68 : vector<16x128xf32>
    %70 = arith.mulf %69, %69 : vector<16x128xf32>
    %71 = arith.mulf %70, %70 : vector<16x128xf32>
    %72 = arith.mulf %69, %71 : vector<16x128xf32>
    %cst_21 = arith.constant dense<0.000000e+00> : vector<16xf32>
    %73 = vector.multi_reduction <add>, %72, %cst_21 [1] : vector<16x128xf32> to vector<16xf32>
    %74 = vector.shape_cast %73 : vector<16xf32> to vector<16x1xf32>
    %75 = math.log %74 : vector<16x1xf32>
    %cst_22 = arith.constant -4.000000e-01 : f32
    %76 = vector.broadcast %cst_22 : f32 to vector<16x1xf32>
    %77 = arith.mulf %76, %75 : vector<16x1xf32>
    %78 = math.exp %77 : vector<16x1xf32>
    %79 = vector.broadcast %78 : vector<16x1xf32> to vector<16x128xf32>
    %80 = arith.mulf %8, %79 : vector<16x128xf32>
    %cst_23 = arith.constant -4.000000e-01 : f32
    %81 = vector.broadcast %cst_23 : f32 to vector<16x128xf32>
    %82 = arith.mulf %81, %80 : vector<16x128xf32>
    %cst_24 = arith.constant 1.000000e+00 : f32
    %83 = vector.broadcast %cst_24 : f32 to vector<16x128xf32>
    %84 = arith.addf %83, %82 : vector<16x128xf32>
    %cst_25 = arith.constant 0.000000e+00 : f32
    %85 = vector.broadcast %cst_25 : f32 to vector<16x128xf32>
    %86 = arith.maximumf %84, %85 : vector<16x128xf32>
    %87 = math.rsqrt %86 : vector<16x128xf32>
    %88 = arith.mulf %87, %87 : vector<16x128xf32>
    %89 = arith.mulf %88, %88 : vector<16x128xf32>
    %90 = arith.mulf %87, %89 : vector<16x128xf32>
    %cst_26 = arith.constant dense<0.000000e+00> : vector<16xf32>
    %91 = vector.multi_reduction <add>, %90, %cst_26 [1] : vector<16x128xf32> to vector<16xf32>
    %92 = vector.shape_cast %91 : vector<16xf32> to vector<16x1xf32>
    %93 = math.log %92 : vector<16x1xf32>
    %cst_27 = arith.constant -4.000000e-01 : f32
    %94 = vector.broadcast %cst_27 : f32 to vector<16x1xf32>
    %95 = arith.mulf %94, %93 : vector<16x1xf32>
    %96 = math.exp %95 : vector<16x1xf32>
    %97 = vector.broadcast %96 : vector<16x1xf32> to vector<16x128xf32>
    %98 = arith.mulf %8, %97 : vector<16x128xf32>
    %cst_28 = arith.constant -4.000000e-01 : f32
    %99 = vector.broadcast %cst_28 : f32 to vector<16x128xf32>
    %100 = arith.mulf %99, %98 : vector<16x128xf32>
    %cst_29 = arith.constant 1.000000e+00 : f32
    %101 = vector.broadcast %cst_29 : f32 to vector<16x128xf32>
    %102 = arith.addf %101, %100 : vector<16x128xf32>
    %cst_30 = arith.constant 0.000000e+00 : f32
    %103 = vector.broadcast %cst_30 : f32 to vector<16x128xf32>
    %104 = arith.maximumf %102, %103 : vector<16x128xf32>
    %105 = math.rsqrt %104 : vector<16x128xf32>
    %106 = arith.mulf %105, %105 : vector<16x128xf32>
    %107 = arith.mulf %106, %106 : vector<16x128xf32>
    %108 = arith.mulf %105, %107 : vector<16x128xf32>
    %cst_31 = arith.constant dense<0.000000e+00> : vector<16xf32>
    %109 = vector.multi_reduction <add>, %108, %cst_31 [1] : vector<16x128xf32> to vector<16xf32>
    %110 = vector.shape_cast %109 : vector<16xf32> to vector<16x1xf32>
    %cst_32 = arith.constant 1.000000e+00 : f32
    %111 = vector.broadcast %cst_32 : f32 to vector<16x1xf32>
    %112 = arith.divf %111, %110 : vector<16x1xf32>
    %113 = math.log %112 : vector<16x1xf32>
    %cst_33 = arith.constant -4.000000e-01 : f32
    %114 = vector.broadcast %cst_33 : f32 to vector<16x1xf32>
    %115 = arith.mulf %114, %113 : vector<16x1xf32>
    %116 = math.exp %115 : vector<16x1xf32>
    %cst_34 = arith.constant 1.000000e+00 : f32
    %117 = vector.broadcast %cst_34 : f32 to vector<16x1xf32>
    %118 = arith.subf %116, %117 : vector<16x1xf32>
    %cst_35 = arith.constant -4.000000e-01 : f32
    %119 = vector.broadcast %cst_35 : f32 to vector<16x1xf32>
    %120 = arith.divf %118, %119 : vector<16x1xf32>
    %cst_36 = arith.constant 0.000000e+00 : f32
    %121 = vector.broadcast %cst_36 : f32 to vector<16x1xf32>
    %122 = arith.subf %121, %120 : vector<16x1xf32>
    %123 = vector.broadcast %122 : vector<16x1xf32> to vector<16x128xf32>
    %124 = arith.subf %8, %123 : vector<16x128xf32>
    %cst_37 = arith.constant -4.000000e-01 : f32
    %125 = vector.broadcast %cst_37 : f32 to vector<16x128xf32>
    %126 = arith.mulf %125, %124 : vector<16x128xf32>
    %cst_38 = arith.constant 1.000000e+00 : f32
    %127 = vector.broadcast %cst_38 : f32 to vector<16x128xf32>
    %128 = arith.addf %127, %126 : vector<16x128xf32>
    %cst_39 = arith.constant 0.000000e+00 : f32
    %129 = vector.broadcast %cst_39 : f32 to vector<16x128xf32>
    %130 = arith.maximumf %128, %129 : vector<16x128xf32>
    %131 = math.rsqrt %130 : vector<16x128xf32>
    %132 = arith.mulf %131, %131 : vector<16x128xf32>
    %133 = arith.mulf %132, %132 : vector<16x128xf32>
    %134 = arith.mulf %131, %133 : vector<16x128xf32>
    %cst_40 = arith.constant 1.000000e+00 : f32
    %135 = vector.broadcast %cst_40 : f32 to vector<16x128xf32>
    %136 = arith.subf %131, %135 : vector<16x128xf32>
    %cst_41 = arith.constant 2.000000e-01 : f32
    %137 = vector.broadcast %cst_41 : f32 to vector<16x128xf32>
    %138 = arith.divf %136, %137 : vector<16x128xf32>
    %139 = arith.mulf %131, %134 : vector<16x128xf32>
    %cst_42 = arith.constant 0.000000e+00 : f32
    %140 = vector.broadcast %cst_42 : f32 to vector<16x128xf32>
    %141 = arith.select %4, %138, %140 : vector<16x128xi1>, vector<16x128xf32>
    %cst_43 = arith.constant dense<0.000000e+00> : vector<16xf32>
    %142 = vector.multi_reduction <add>, %141, %cst_43 [1] : vector<16x128xf32> to vector<16xf32>
    %cst_44 = arith.constant dense<0.000000e+00> : vector<16xf32>
    %143 = vector.multi_reduction <add>, %138, %cst_44 [1] : vector<16x128xf32> to vector<16xf32>
    %cst_45 = arith.constant 7.87401571E-4 : f32
    %144 = vector.broadcast %cst_45 : f32 to vector<16xf32>
    %145 = arith.mulf %144, %143 : vector<16xf32>
    %cst_46 = arith.constant 0.899212599 : f32
    %146 = vector.broadcast %cst_46 : f32 to vector<16xf32>
    %147 = arith.mulf %146, %142 : vector<16xf32>
    %148 = arith.addf %145, %147 : vector<16xf32>
    %cst_47 = arith.constant -1.22841716 : f32
    %149 = vector.broadcast %cst_47 : f32 to vector<16xf32>
    %150 = arith.subf %149, %148 : vector<16xf32>
    %cst_48 = arith.constant dense<0.000000e+00> : vector<16xf32>
    %151 = vector.multi_reduction <add>, %139, %cst_48 [1] : vector<16x128xf32> to vector<16xf32>
    %cst_49 = arith.constant 0.833333313 : f32
    %152 = vector.broadcast %cst_49 : f32 to vector<16xf32>
    %153 = arith.mulf %151, %152 : vector<16xf32>
    %154 = arith.addf %150, %153 : vector<16xf32>
    %c0_50 = arith.constant 0 : index
    %c0_51 = arith.constant 0 : index
    %c0_52 = arith.constant 0 : index
    %155 = vector.load %arg3[%c0_50, %c0_51, %c0_52] : memref<1x1x16xf32, #tpu.memory_space<vmem>>, vector<1x1x16xf32>
    %156 = vector.shape_cast %155 : vector<1x1x16xf32> to vector<16xf32>
    %157 = vector.shape_cast %154 : vector<16xf32> to vector<1x1x16xf32>
    tpu.vector_store %arg3[%c0_50, %c0_51, %c0_52], %157 {strides = array<i32>} : memref<1x1x16xf32, #tpu.memory_space<vmem>>, vector<1x1x16xf32>,
    return
  }
  func.func @transform_0(%arg0: i32) -> (i32, i32) {
    %c0_i32 = arith.constant 0 : i32
    %c0_i32_0 = arith.constant 0 : i32
    return %arg0, %c0_i32 : i32, i32
  }
  func.func @transform_1(%arg0: i32) -> (i32, i32) {
    %c0_i32 = arith.constant 0 : i32
    %c0_i32_0 = arith.constant 0 : i32
    return %arg0, %c0_i32 : i32, i32
  }
  func.func @transform_2(%arg0: i32) -> (i32, i32, i32) {
    %c0_i32 = arith.constant 0 : i32
    %c0_i32_0 = arith.constant 0 : i32
    %c0_i32_1 = arith.constant 0 : i32
    return %arg0, %c0_i32, %c0_i32_0 : i32, i32, i32
  }
}

</mosaic_0001>

<llo_original>
// kernel: tpu_custom_call.1
$region0: #{tpu_custom_call.1}
  #allocation0 [shape = 'u32[]', space=smem, size = 0x4, offset = 0x4, fixed_abs, tag = 'smem constant byte address 0x4 - core index']
  #allocation1 [shape = 'u32[72,128]{1,0:T(1,128)}', space=vmem, size = 0x9000, scoped, tag = 'internal scratch']
  %s0 = inlined_call_operand.vmem [shape: s32[16,1], index: 0, kind: input, shape index: {}]
  %s1 = inlined_call_operand.vmem [shape: f32[16,128], index: 1, kind: input, shape index: {}]
  %s2 = inlined_call_operand.hbm [shape: f32[1,1,16], index: 2, kind: output, shape index: {}]
  %s3 = sld [smem:[#allocation0]]
  $region18: #{tpu_custom_call.1} parent=0
    _
  %s5 = ssub.s32 1, %s3
  %s6 = scalar_select 0, %s5, %s3
  $region1: #{tpu_custom_call.1} parent=0
    #allocation2 [shape = 'u8[512]{0}', space=vmem, size = 0x400, scoped, tag = 'output window, operand 0, single buffered']
    #allocation3 [shape = 's32[1]{0}', space=sflag, size = 0x4, scoped, tag = 'scoped memory for tpu_custom_call.1']
    %7 = vsyncpa [#allocation3], 0
    // Predicated region
    $region2: #{tpu_custom_call.1} parent=1 // pred_check
      _
    $region3: #{tpu_custom_call.1} parent=1 // pred_check_branch
      %9 = sbr.rel (0) target = $region5
    $region4: #{tpu_custom_call.1} parent=1 // pred_region
      _
    $region5: #{tpu_custom_call.1} parent=1 // pred_fallthru
      _
    // Predicated region
    $region6: #{tpu_custom_call.1} parent=1 // pred_check
      _
    $region7: #{tpu_custom_call.1} parent=1 // pred_check_branch
      %11 = sbr.rel (0) target = $region9
    $region8: #{tpu_custom_call.1} parent=1 // pred_region
      _
    $region9: #{tpu_custom_call.1} parent=1 // pred_fallthru
      _
    %v12 = vld [vmem:[%s1] sm:$0xff]
    %v13 = vld [vmem:[%s1 + $0x8] sm:$0xff]
    %v14 = vld [vmem:[%s0] sm:$0xff]
    %v15 = vld [vmem:[%s0 + $0x8] sm:$0xff]
    %v16 = vlaneseq
    %v17 = vand.u32 %v16, 127
    %18 = vset.pattern.permute.xlu0 0
    %19 = vperm.xlu0 %18, %v14
    %v20 = vpop.permute.xlu0 %19
    %21 = vset.pattern.permute.xlu0 0
    %22 = vperm.xlu0 %21, %v15
    %v23 = vpop.permute.xlu0 %22
    %vm24 = vcmp.eq.s32.totalorder %v17, %v20
    %vm25 = vcmp.eq.s32.totalorder %v17, %v23
    %26 = vmax.xlane.f32.xlu0 %v12
    %v27 = vpop.xlane.xlu0 %26
    %28 = vmax.xlane.f32.xlu0 %v13
    %v29 = vpop.xlane.xlu0 %28
    %v30 = vsub.f32 %v12, %v27
    %v31 = vsub.f32 %v13, %v29
    %v32 = vmul.f32 %v30, -0.4
    %v33 = vmul.f32 %v31, -0.4
    %v34 = vadd.f32 %v32, 1.0
    %v35 = vadd.f32 %v33, 1.0
    %v36 = vmax.f32 %v34, 0.0
    %v37 = vmax.f32 %v35, 0.0
    %v38 = vrsqrt.pop %v36
    %v39 = vmul.f32 %v38, %v36
    %v40 = vmul.f32 %v39, %v38
    %v41 = vmul.f32 0.5, %v40
    %v42 = vsub.f32 1.5, %v41
    %v43 = vmul.f32 %v38, %v42
    %vm44 = vweird.f32 %v36
    %vm45 = vweird.f32 %v38
    %vm46 = vmor %vm44, %vm45
    %v47 = vsel %vm46, %v38, %v43
    %v48 = vrsqrt.pop %v37
    %v49 = vmul.f32 %v48, %v37
    %v50 = vmul.f32 %v49, %v48
    %v51 = vmul.f32 0.5, %v50
    %v52 = vsub.f32 1.5, %v51
    %v53 = vmul.f32 %v48, %v52
    %vm54 = vweird.f32 %v37
    %vm55 = vweird.f32 %v48
    %vm56 = vmor %vm54, %vm55
    %v57 = vsel %vm56, %v48, %v53
    %v58 = vmul.f32 %v47, %v47
    %v59 = vmul.f32 %v57, %v57
    %v60 = vmul.f32 %v58, %v58
    %v61 = vmul.f32 %v59, %v59
    %v62 = vmul.f32 %v47, %v60
    %v63 = vmul.f32 %v57, %v61
    %64 = vadd.xlane.f32.xlu0 %v62
    %v65 = vpop.xlane.xlu0 %64
    %66 = vadd.xlane.f32.xlu0 %v63
    %v67 = vpop.xlane.xlu0 %66
    %v68 = vlog2.pop %v65
    %v69 = vmul.f32 %v68, 0.6931472
    %v70 = vlog2.pop %v67
    %v71 = vmul.f32 %v70, 0.6931472
    %v72 = vmul.f32 %v69, -0.4
    %v73 = vmul.f32 %v71, -0.4
    %v74 = vmul.f32 %v72, 1.442695
    %v75 = vpow.pop %v74
    %v76 = vmul.f32 %v73, 1.442695
    %v77 = vpow.pop %v76
    %v78 = vmul.f32 %v30, %v75
    %v79 = vmul.f32 %v31, %v77
    %v80 = vmul.f32 %v78, -0.4
    %v81 = vmul.f32 %v79, -0.4
    %v82 = vadd.f32 %v80, 1.0
    %v83 = vadd.f32 %v81, 1.0
    %v84 = vmax.f32 %v82, 0.0
    %v85 = vmax.f32 %v83, 0.0
    %v86 = vrsqrt.pop %v84
    %v87 = vmul.f32 %v86, %v84
    %v88 = vmul.f32 %v87, %v86
    %v89 = vmul.f32 0.5, %v88
    %v90 = vsub.f32 1.5, %v89
    %v91 = vmul.f32 %v86, %v90
    %vm92 = vweird.f32 %v84
    %vm93 = vweird.f32 %v86
    %vm94 = vmor %vm92, %vm93
    %v95 = vsel %vm94, %v86, %v91
    %v96 = vrsqrt.pop %v85
    %v97 = vmul.f32 %v96, %v85
    %v98 = vmul.f32 %v97, %v96
    %v99 = vmul.f32 0.5, %v98
    %v100 = vsub.f32 1.5, %v99
    %v101 = vmul.f32 %v96, %v100
    %vm102 = vweird.f32 %v85
    %vm103 = vweird.f32 %v96
    %vm104 = vmor %vm102, %vm103
    %v105 = vsel %vm104, %v96, %v101
    %v106 = vmul.f32 %v95, %v95
    %v107 = vmul.f32 %v105, %v105
    %v108 = vmul.f32 %v106, %v106
    %v109 = vmul.f32 %v107, %v107
    %v110 = vmul.f32 %v95, %v108
    %v111 = vmul.f32 %v105, %v109
    %112 = vadd.xlane.f32.xlu0 %v110
    %v113 = vpop.xlane.xlu0 %112
    %114 = vadd.xlane.f32.xlu0 %v111
    %v115 = vpop.xlane.xlu0 %114
    %v116 = vlog2.pop %v113
    %v117 = vmul.f32 %v116, 0.6931472
    %v118 = vlog2.pop %v115
    %v119 = vmul.f32 %v118, 0.6931472
    %v120 = vmul.f32 %v117, -0.4
    %v121 = vmul.f32 %v119, -0.4
    %v122 = vmul.f32 %v120, 1.442695
    %v123 = vpow.pop %v122
    %v124 = vmul.f32 %v121, 1.442695
    %v125 = vpow.pop %v124
    %v126 = vmul.f32 %v30, %v123
    %v127 = vmul.f32 %v31, %v125
    %v128 = vmul.f32 %v126, -0.4
    %v129 = vmul.f32 %v127, -0.4
    %v130 = vadd.f32 %v128, 1.0
    %v131 = vadd.f32 %v129, 1.0
    %v132 = vmax.f32 %v130, 0.0
    %v133 = vmax.f32 %v131, 0.0
    %v134 = vrsqrt.pop %v132
    %v135 = vmul.f32 %v134, %v132
    %v136 = vmul.f32 %v135, %v134
    %v137 = vmul.f32 0.5, %v136
    %v138 = vsub.f32 1.5, %v137
    %v139 = vmul.f32 %v134, %v138
    %vm140 = vweird.f32 %v132
    %vm141 = vweird.f32 %v134
    %vm142 = vmor %vm140, %vm141
    %v143 = vsel %vm142, %v134, %v139
    %v144 = vrsqrt.pop %v133
    %v145 = vmul.f32 %v144, %v133
    %v146 = vmul.f32 %v145, %v144
    %v147 = vmul.f32 0.5, %v146
    %v148 = vsub.f32 1.5, %v147
    %v149 = vmul.f32 %v144, %v148
    %vm150 = vweird.f32 %v133
    %vm151 = vweird.f32 %v144
    %vm152 = vmor %vm150, %vm151
    %v153 = vsel %vm152, %v144, %v149
    %v154 = vmul.f32 %v143, %v143
    %v155 = vmul.f32 %v153, %v153
    %v156 = vmul.f32 %v154, %v154
    %v157 = vmul.f32 %v155, %v155
    %v158 = vmul.f32 %v143, %v156
    %v159 = vmul.f32 %v153, %v157
    %160 = vadd.xlane.f32.xlu0 %v158
    %v161 = vpop.xlane.xlu0 %160
    %162 = vadd.xlane.f32.xlu0 %v159
    %v163 = vpop.xlane.xlu0 %162
    %v164 = vlog2.pop %v161
    %v165 = vmul.f32 %v164, 0.6931472
    %v166 = vlog2.pop %v163
    %v167 = vmul.f32 %v166, 0.6931472
    %v168 = vmul.f32 %v165, -0.4
    %v169 = vmul.f32 %v167, -0.4
    %v170 = vmul.f32 %v168, 1.442695
    %v171 = vpow.pop %v170
    %v172 = vmul.f32 %v169, 1.442695
    %v173 = vpow.pop %v172
    %v174 = vmul.f32 %v30, %v171
    %v175 = vmul.f32 %v31, %v173
    %v176 = vmul.f32 %v174, -0.4
    %v177 = vmul.f32 %v175, -0.4
    %v178 = vadd.f32 %v176, 1.0
    %v179 = vadd.f32 %v177, 1.0
    %v180 = vmax.f32 %v178, 0.0
    %v181 = vmax.f32 %v179, 0.0
    %v182 = vrsqrt.pop %v180
    %v183 = vmul.f32 %v182, %v180
    %v184 = vmul.f32 %v183, %v182
    %v185 = vmul.f32 0.5, %v184
    %v186 = vsub.f32 1.5, %v185
    %v187 = vmul.f32 %v182, %v186
    %vm188 = vweird.f32 %v180
    %vm189 = vweird.f32 %v182
    %vm190 = vmor %vm188, %vm189
    %v191 = vsel %vm190, %v182, %v187
    %v192 = vrsqrt.pop %v181
    %v193 = vmul.f32 %v192, %v181
    %v194 = vmul.f32 %v193, %v192
    %v195 = vmul.f32 0.5, %v194
    %v196 = vsub.f32 1.5, %v195
    %v197 = vmul.f32 %v192, %v196
    %vm198 = vweird.f32 %v181
    %vm199 = vweird.f32 %v192
    %vm200 = vmor %vm198, %vm199
    %v201 = vsel %vm200, %v192, %v197
    %v202 = vmul.f32 %v191, %v191
    %v203 = vmul.f32 %v201, %v201
    %v204 = vmul.f32 %v202, %v202
    %v205 = vmul.f32 %v203, %v203
    %v206 = vmul.f32 %v191, %v204
    %v207 = vmul.f32 %v201, %v205
    %208 = vadd.xlane.f32.xlu0 %v206
    %v209 = vpop.xlane.xlu0 %208
    %210 = vadd.xlane.f32.xlu0 %v207
    %v211 = vpop.xlane.xlu0 %210
    %v212 = vlog2.pop %v209
    %v213 = vmul.f32 %v212, 0.6931472
    %v214 = vlog2.pop %v211
    %v215 = vmul.f32 %v214, 0.6931472
    %v216 = vmul.f32 %v213, -0.4
    %v217 = vmul.f32 %v215, -0.4
    %v218 = vmul.f32 %v216, 1.442695
    %v219 = vpow.pop %v218
    %v220 = vmul.f32 %v217, 1.442695
    %v221 = vpow.pop %v220
    %v222 = vmul.f32 %v30, %v219
    %v223 = vmul.f32 %v31, %v221
    %v224 = vmul.f32 %v222, -0.4
    %v225 = vmul.f32 %v223, -0.4
    %v226 = vadd.f32 %v224, 1.0
    %v227 = vadd.f32 %v225, 1.0
    %v228 = vmax.f32 %v226, 0.0
    %v229 = vmax.f32 %v227, 0.0
    %v230 = vrsqrt.pop %v228
    %v231 = vmul.f32 %v230, %v228
    %v232 = vmul.f32 %v231, %v230
    %v233 = vmul.f32 0.5, %v232
    %v234 = vsub.f32 1.5, %v233
    %v235 = vmul.f32 %v230, %v234
    %vm236 = vweird.f32 %v228
    %vm237 = vweird.f32 %v230
    %vm238 = vmor %vm236, %vm237
    %v239 = vsel %vm238, %v230, %v235
    %v240 = vrsqrt.pop %v229
    %v241 = vmul.f32 %v240, %v229
    %v242 = vmul.f32 %v241, %v240
    %v243 = vmul.f32 0.5, %v242
    %v244 = vsub.f32 1.5, %v243
    %v245 = vmul.f32 %v240, %v244
    %vm246 = vweird.f32 %v229
    %vm247 = vweird.f32 %v240
    %vm248 = vmor %vm246, %vm247
    %v249 = vsel %vm248, %v240, %v245
    %v250 = vmul.f32 %v239, %v239
    %v251 = vmul.f32 %v249, %v249
    %v252 = vmul.f32 %v250, %v250
    %v253 = vmul.f32 %v251, %v251
    %v254 = vmul.f32 %v239, %v252
    %v255 = vmul.f32 %v249, %v253
    %256 = vadd.xlane.f32.xlu0 %v254
    %v257 = vpop.xlane.xlu0 %256
    %258 = vadd.xlane.f32.xlu0 %v255
    %v259 = vpop.xlane.xlu0 %258
    %v260 = vlog2.pop %v257
    %v261 = vmul.f32 %v260, 0.6931472
    %v262 = vlog2.pop %v259
    %v263 = vmul.f32 %v262, 0.6931472
    %v264 = vmul.f32 %v261, -0.4
    %v265 = vmul.f32 %v263, -0.4
    %v266 = vmul.f32 %v264, 1.442695
    %v267 = vpow.pop %v266
    %v268 = vmul.f32 %v265, 1.442695
    %v269 = vpow.pop %v268
    %v270 = vmul.f32 %v30, %v267
    %v271 = vmul.f32 %v31, %v269
    %v272 = vmul.f32 %v270, -0.4
    %v273 = vmul.f32 %v271, -0.4
    %v274 = vadd.f32 %v272, 1.0
    %v275 = vadd.f32 %v273, 1.0
    %v276 = vmax.f32 %v274, 0.0
    %v277 = vmax.f32 %v275, 0.0
    %v278 = vrsqrt.pop %v276
    %v279 = vmul.f32 %v278, %v276
    %v280 = vmul.f32 %v279, %v278
    %v281 = vmul.f32 0.5, %v280
    %v282 = vsub.f32 1.5, %v281
    %v283 = vmul.f32 %v278, %v282
    %vm284 = vweird.f32 %v276
    %vm285 = vweird.f32 %v278
    %vm286 = vmor %vm284, %vm285
    %v287 = vsel %vm286, %v278, %v283
    %v288 = vrsqrt.pop %v277
    %v289 = vmul.f32 %v288, %v277
    %v290 = vmul.f32 %v289, %v288
    %v291 = vmul.f32 0.5, %v290
    %v292 = vsub.f32 1.5, %v291
    %v293 = vmul.f32 %v288, %v292
    %vm294 = vweird.f32 %v277
    %vm295 = vweird.f32 %v288
    %vm296 = vmor %vm294, %vm295
    %v297 = vsel %vm296, %v288, %v293
    %v298 = vmul.f32 %v287, %v287
    %v299 = vmul.f32 %v297, %v297
    %v300 = vmul.f32 %v298, %v298
    %v301 = vmul.f32 %v299, %v299
    %v302 = vmul.f32 %v287, %v300
    %v303 = vmul.f32 %v297, %v301
    %304 = vadd.xlane.f32.xlu0 %v302
    %v305 = vpop.xlane.xlu0 %304
    %306 = vadd.xlane.f32.xlu0 %v303
    %v307 = vpop.xlane.xlu0 %306
    %v308 = vrcp.pop %v305
    %v309 = vmul.f32 %v305, %v308
    %v310 = vsub.f32 1.0, %v309
    %v311 = vmul.f32 %v308, %v310
    %v312 = vadd.f32 %v308, %v311
    %vm313 = vweird.f32 %v305
    %vm314 = vweird.f32 %v308
    %vm315 = vmor %vm313, %vm314
    %v316 = vsel %vm315, %v308, %v312
    %v317 = vand.u32 2147483647, %v305
    %vm318 = vcmp.eq.f32.partialorder %v317, 8.507059e+37
    %v319 = vand.u32 %v305, 2147483648
    %v320 = vor.u32 1.1754944e-38, %v319
    %v321 = vsel %vm318, %v320, %v316
    %v322 = vmul.f32 1.0, %v321
    %v323 = vrcp.pop %v307
    %v324 = vmul.f32 %v307, %v323
    %v325 = vsub.f32 1.0, %v324
    %v326 = vmul.f32 %v323, %v325
    %v327 = vadd.f32 %v323, %v326
    %vm328 = vweird.f32 %v307
    %vm329 = vweird.f32 %v323
    %vm330 = vmor %vm328, %vm329
    %v331 = vsel %vm330, %v323, %v327
    %v332 = vand.u32 2147483647, %v307
    %vm333 = vcmp.eq.f32.partialorder %v332, 8.507059e+37
    %v334 = vand.u32 %v307, 2147483648
    %v335 = vor.u32 1.1754944e-38, %v334
    %v336 = vsel %vm333, %v335, %v331
    %v337 = vmul.f32 1.0, %v336
    %v338 = vlog2.pop %v322
    %v339 = vmul.f32 %v338, 0.6931472
    %v340 = vlog2.pop %v337
    %v341 = vmul.f32 %v340, 0.6931472
    %v342 = vmul.f32 %v339, -0.4
    %v343 = vmul.f32 %v341, -0.4
    %v344 = vmul.f32 %v342, 1.442695
    %v345 = vpow.pop %v344
    %v346 = vmul.f32 %v343, 1.442695
    %v347 = vpow.pop %v346
    %v348 = vsub.f32 %v345, 1.0
    %v349 = vsub.f32 %v347, 1.0
    %v350 = vrcp.pop -0.4
    %v351 = vmul.f32 -0.4, %v350
    %v352 = vsub.f32 1.0, %v351
    %v353 = vmul.f32 %v350, %v352
    %v354 = vadd.f32 %v350, %v353
    %vm355 = vweird.f32 %v350
    %v356 = vsel %vm355, %v350, %v354
    %v357 = vmul.f32 %v348, %v356
    %v358 = vmul.f32 %v349, %v356
    %v359 = vsub.f32 0.0, %v357
    %v360 = vsub.f32 0.0, %v358
    %v361 = vsub.f32 %v30, %v359
    %v362 = vsub.f32 %v31, %v360
    %v363 = vmul.f32 %v361, -0.4
    %v364 = vmul.f32 %v362, -0.4
    %v365 = vadd.f32 %v363, 1.0
    %v366 = vadd.f32 %v364, 1.0
    %v367 = vmax.f32 %v365, 0.0
    %v368 = vmax.f32 %v366, 0.0
    %v369 = vrsqrt.pop %v367
    %v370 = vmul.f32 %v369, %v367
    %v371 = vmul.f32 %v370, %v369
    %v372 = vmul.f32 0.5, %v371
    %v373 = vsub.f32 1.5, %v372
    %v374 = vmul.f32 %v369, %v373
    %vm375 = vweird.f32 %v367
    %vm376 = vweird.f32 %v369
    %vm377 = vmor %vm375, %vm376
    %v378 = vsel %vm377, %v369, %v374
    %v379 = vrsqrt.pop %v368
    %v380 = vmul.f32 %v379, %v368
    %v381 = vmul.f32 %v380, %v379
    %v382 = vmul.f32 0.5, %v381
    %v383 = vsub.f32 1.5, %v382
    %v384 = vmul.f32 %v379, %v383
    %vm385 = vweird.f32 %v368
    %vm386 = vweird.f32 %v379
    %vm387 = vmor %vm385, %vm386
    %v388 = vsel %vm387, %v379, %v384
    %v389 = vmul.f32 %v378, %v378
    %v390 = vmul.f32 %v388, %v388
    %v391 = vmul.f32 %v389, %v389
    %v392 = vmul.f32 %v390, %v390
    %v393 = vmul.f32 %v378, %v391
    %v394 = vmul.f32 %v388, %v392
    %v395 = vsub.f32 %v378, 1.0
    %v396 = vsub.f32 %v388, 1.0
    %v397 = vrcp.pop 0.2
    %v398 = vmul.f32 0.2, %v397
    %v399 = vsub.f32 1.0, %v398
    %v400 = vmul.f32 %v397, %v399
    %v401 = vadd.f32 %v397, %v400
    %vm402 = vweird.f32 %v397
    %v403 = vsel %vm402, %v397, %v401
    %v404 = vmul.f32 %v395, %v403
    %v405 = vmul.f32 %v396, %v403
    %v406 = vmul.f32 %v378, %v393
    %v407 = vmul.f32 %v388, %v394
    %v408 = vsel %vm24, %v404, 0.0
    %v409 = vsel %vm25, %v405, 0.0
    %410 = vadd.xlane.f32.xlu0 %v408
    %v411 = vpop.xlane.xlu0 %410
    %412 = vadd.xlane.f32.xlu0 %v409
    %v413 = vpop.xlane.xlu0 %412
    %414 = vadd.xlane.f32.xlu0 %v404
    %v415 = vpop.xlane.xlu0 %414
    %416 = vadd.xlane.f32.xlu0 %v405
    %v417 = vpop.xlane.xlu0 %416
    %v418 = vmul.f32 %v415, 0.0007874016
    %v419 = vmul.f32 %v417, 0.0007874016
    %v420 = vmul.f32 %v411, 0.8992126
    %v421 = vmul.f32 %v413, 0.8992126
    %v422 = vadd.f32 %v418, %v420
    %v423 = vadd.f32 %v419, %v421
    %v424 = vsub.f32 -1.2284172, %v422
    %v425 = vsub.f32 -1.2284172, %v423
    %426 = vadd.xlane.f32.xlu0 %v406
    %v427 = vpop.xlane.xlu0 %426
    %428 = vadd.xlane.f32.xlu0 %v407
    %v429 = vpop.xlane.xlu0 %428
    %v430 = vmul.f32 %v427, 0.8333333
    %v431 = vmul.f32 %v429, 0.8333333
    %v432 = vadd.f32 %v424, %v430
    %v433 = vadd.f32 %v425, %v431
    %v436 = vperm.slane %v432, %v17
    %v437 = vadd.s32 %v17, 4294967288
    %v438 = vperm.slane %v433, %v437
    %vm439 = vcmask 130112
    %v440 = vsel %vm439, %v438, %v436
    %vm442 = vcmask 122880
    %443 = vst.msk [vmem:[#allocation2] sm:$0x1] %vm442, %v440
    // Predicated region
    $region10: #{tpu_custom_call.1} parent=1 // pred_check
      _
    $region11: #{tpu_custom_call.1} parent=1 // pred_check_branch
      %445 = sbr.rel (0) target = $region13
    $region12: #{tpu_custom_call.1} parent=1 // pred_region
      %447 = vsyncadd [#allocation3], 0
      %s449 = sshll.u32 [#allocation2], 4
      %s450 = int_to_ptr.vmem [resolvable:$true] %s449
      %s451 = sshll.u32 %s2, 4
      %s452 = int_to_ptr.hbm [resolvable:$true] %s451
      %454 = dma.vmem_to_hbm [thread:$0]  %s450, 16, %s452, [#allocation3]
    $region13: #{tpu_custom_call.1} parent=1 // pred_fallthru
      _
    // Predicated region
    $region14: #{tpu_custom_call.1} parent=1 // pred_check
      _
    $region15: #{tpu_custom_call.1} parent=1 // pred_check_branch
      %456 = sbr.rel (0) target = $region17
    $region16: #{tpu_custom_call.1} parent=1 // pred_region
      %458 = dma.done [#allocation3], 16
    $region17: #{tpu_custom_call.1} parent=1 // pred_fallthru
      _
    %459 = vsyncpa [#allocation3], 1

</llo_original>
